<compile_context>
chip_gen: v5e
topology: v5e:2x2
jax: 0.10.0
libtpu: 0.0.40
codegen_flags: <defaults>
</compile_context>

<pallas_src>
import jax
import jax.numpy as jnp
from jax.experimental import pallas as pl
from jax.experimental.pallas import tpu as pltpu


def _round_up(x: int, m: int) -> int:
    return ((x + m - 1) // m) * m


def _device_kind() -> str:
    try:
        return jax.devices()[0].device_kind.lower()
    except Exception:
        return ""


# ----------------------------- kernels -----------------------------

def _linear_kernel_out_acc(x_ref, w_ref, b_ref, o_ref):
    """f32 output: accumulate directly into the resident output block (no scratch)."""
    k = pl.program_id(2)
    partial = jnp.dot(x_ref[...], w_ref[...], preferred_element_type=jnp.float32)

    @pl.when(k == 0)
    def _init_store():
        o_ref[...] = partial + b_ref[...]          # bias folded in once per (i,j) tile

    @pl.when(k != 0)
    def _accumulate():
        o_ref[...] = o_ref[...] + partial


def _linear_kernel_scratch_acc(x_ref, w_ref, b_ref, o_ref, acc_ref):
    """Non-f32 output: keep an f32 scratch accumulator, cast once at finalize."""
    k = pl.program_id(2)
    partial = jnp.dot(x_ref[...], w_ref[...], preferred_element_type=jnp.float32)

    @pl.when(k == 0)
    def _init_store():
        acc_ref[...] = partial                     # direct store, no zero-init pass

    @pl.when(k != 0)
    def _accumulate():
        acc_ref[...] = acc_ref[...] + partial

    @pl.when(k == pl.num_programs(2) - 1)
    def _finalize():
        o_ref[...] = (acc_ref[...] + b_ref[...]).astype(o_ref.dtype)


# ----------------------------- wrapper ------------------------------

def linear_net_forward(x, weight, bias, *, cast_inputs_to=None, allow_xla_fast_path=False):
    """LinearNet.forward: flatten all non-batch dims, then y = x @ W^T + b.

    cast_inputs_to: optionally cast x / W to e.g. jnp.bfloat16 (MXU-native) while keeping
      f32 accumulation.  Default None = keep input dtype (bit-accurate vs f32 reference).
    """
    B = x.shape[0]
    x2d = x.reshape(B, -1)                      # x.view(x.size()[0], -1)
    K = x2d.shape[1]
    N = weight.shape[0]                         # n_classes
    out_dtype = x2d.dtype

    # Optional tiny-problem bypass (kept off by default so the Pallas path is exercised).
    if allow_xla_fast_path and B * K * N < (1 << 16):
        return (x2d @ weight.T + bias).astype(out_dtype)

    # ---- generation-aware tile budget ----
    kind = _device_kind()
    is_v5e = ("v5 lite" in kind) or ("v5e" in kind) or ("v5lite" in kind)
    is_v7 = "v7" in kind
    n_parallel_cores = 2 if is_v7 else 1
    max_tm, max_tn, max_tk = 512, (256 if is_v5e else 512), 1024

    # ---- choose tiles (8-sublane / 128-lane aligned, minimize padding waste) ----
    if B < 128:
        tm = _round_up(max(B, 1), 8)
    else:
        cands = [t for t in (512, 256, 128) if t <= max_tm]
        tm = min(cands, key=lambda t: (_round_up(B, t) - B, -t))
    if N <= 128:
        tn = 128
    else:
        cands = [t for t in (512, 256, 128) if t <= max_tn]
        tn = min(cands, key=lambda t: (_round_up(N, t) - N, -t))
    tk = max_tk if K >= max_tk else _round_up(max(K, 1), 128)

    # v7x: make sure both TensorCores get at least one (i,j) block when possible.
    if n_parallel_cores >= 2:
        m_blocks = _round_up(B, tm) // tm
        n_blocks = _round_up(N, tn) // tn
        if m_blocks * n_blocks < 2:
            if _round_up(N, tn) >= 256:
                tn = 128
            elif _round_up(B, tm) >= 16:
                tm = _round_up(max(_round_up(B, tm) // 2, 8), 8)

    M_pad = _round_up(B, tm)
    N_pad = _round_up(N, tn)
    K_pad = _round_up(K, tk)

    compute_dtype = jnp.dtype(cast_inputs_to) if cast_inputs_to is not None else x2d.dtype

    # ---- wrapper-side layout plumbing (skip pads when already aligned; jit with the call
    #      so the parameter-side transpose/pad can be fused / const-folded) ----
    x_p = x2d.astype(compute_dtype) if compute_dtype != x2d.dtype else x2d
    if (M_pad, K_pad) != (B, K):
        x_p = jnp.pad(x_p, ((0, M_pad - B), (0, K_pad - K)))          # zero-fill K pad

    w_p = weight.T.astype(compute_dtype)                              # (K, N) for the MXU
    if (K_pad, N_pad) != (K, N):
        w_p = jnp.pad(w_p, ((0, K_pad - K), (0, N_pad - N)))

    b_p = bias.astype(jnp.float32)
    if N_pad != N:
        b_p = jnp.pad(b_p, (0, N_pad - N))
    b_p = b_p.reshape(1, N_pad)

    grid = (M_pad // tm, N_pad // tn, K_pad // tk)

    use_out_acc = jnp.dtype(out_dtype) == jnp.dtype(jnp.float32)
    kernel = _linear_kernel_out_acc if use_out_acc else _linear_kernel_scratch_acc
    scratch = [] if use_out_acc else [pltpu.VMEM((tm, tn), jnp.float32)]

    # ---- VMEM budget (double-buffered x/w/out + bias + optional acc) ----
    item = jnp.dtype(compute_dtype).itemsize
    out_item = jnp.dtype(out_dtype).itemsize
    vmem_est = (2 * (tm * tk + tk * tn) * item
                + 2 * tm * tn * out_item
                + 2 * N_pad * 4
                + (0 if use_out_acc else tm * tn * 4))
    vmem_limit = int(min(64 * 2 ** 20, max(32 * 2 ** 20, 2 * vmem_est)))

    cost = pl.CostEstimate(
        flops=2 * M_pad * N_pad * K_pad,
        transcendentals=0,
        bytes_accessed=int((M_pad * K_pad + K_pad * N_pad) * item
                           + M_pad * N_pad * out_item + N_pad * 4),
    )

    out_p = pl.pallas_call(
        kernel,
        out_shape=jax.ShapeDtypeStruct((M_pad, N_pad), out_dtype),
        grid_spec=pltpu.PrefetchScalarGridSpec(
            num_scalar_prefetch=0,
            grid=grid,
            in_specs=[
                pl.BlockSpec((tm, tk), lambda i, j, k: (i, k)),
                pl.BlockSpec((tk, tn), lambda i, j, k: (k, j)),
                pl.BlockSpec((1, tn), lambda i, j, k: (0, j)),
            ],
            out_specs=pl.BlockSpec((tm, tn), lambda i, j, k: (i, j)),
            scratch_shapes=scratch,
        ),
        compiler_params=pltpu.CompilerParams(
            dimension_semantics=("parallel", "parallel", "arbitrary"),
            vmem_limit_bytes=vmem_limit,
        ),
        cost_estimate=cost,
    )(x_p, w_p, b_p)

    return out_p[:B, :N]


if __name__ == "__main__":
    # Small shapes consistent with the module: batch=2, n_input=32, n_classes=8.
    batch, n_input, n_classes = 2, 32, 8

    key = jax.random.PRNGKey(0)
    kx, kw, kb = jax.random.split(key, 3)

    # Deterministic parameter init mimicking nn.Linear: U(-1/sqrt(fan_in), 1/sqrt(fan_in)).
    bound = 1.0 / jnp.sqrt(jnp.float32(n_input))
    weight = jax.random.uniform(kw, (n_classes, n_input), jnp.float32, -bound, bound)
    bias = jax.random.uniform(kb, (n_classes,), jnp.float32, -bound, bound)

    x = jax.random.normal(kx, (batch, n_input), jnp.float32)

    fwd = jax.jit(linear_net_forward)
    y = fwd(x, weight, bias)
    jax.block_until_ready(y)

    # Sanity-check against plain JAX reference.
    y_ref = x.reshape(batch, -1) @ weight.T + bias
    assert y.shape == (batch, n_classes)
    assert jnp.allclose(y, y_ref, atol=1e-5, rtol=1e-5)

    print("KERNEL_OK")
</pallas_src>

<mosaic_0001>
module attributes {stable_mosaic.version = 11 : i64} {
  func.func @_linear_kernel_out_acc(%arg0: i32, %arg1: i32, %arg2: i32, %arg3: memref<8x128xf32, #tpu.memory_space<vmem>>, %arg4: memref<128x128xf32, #tpu.memory_space<vmem>>, %arg5: memref<1x128xf32, #tpu.memory_space<vmem>>, %arg6: memref<8x128xf32, #tpu.memory_space<vmem>>) attributes {dimension_semantics = [#tpu.dimension_semantics<parallel>, #tpu.dimension_semantics<parallel>, #tpu.dimension_semantics<arbitrary>], iteration_bounds = array<i64: 1, 1, 1>, scalar_prefetch = 0 : i64, scratch_operands = 0 : i64, tpu.core_type = #tpu.core_type<tc>, window_params = [{transform_indices = @transform_0, window_bounds = array<i64: 8, 128>}, {transform_indices = @transform_1, window_bounds = array<i64: 128, 128>}, {transform_indices = @transform_2, window_bounds = array<i64: 1, 128>}, {transform_indices = @transform_3, window_bounds = array<i64: 8, 128>}]} {
    %c0 = arith.constant 0 : index
    %c0_0 = arith.constant 0 : index
    %0 = vector.load %arg3[%c0, %c0_0] : memref<8x128xf32, #tpu.memory_space<vmem>>, vector<8x128xf32>
    %c0_1 = arith.constant 0 : index
    %c0_2 = arith.constant 0 : index
    %1 = vector.load %arg4[%c0_1, %c0_2] : memref<128x128xf32, #tpu.memory_space<vmem>>, vector<128x128xf32>
    %cst = arith.constant dense<0.000000e+00> : vector<8x128xf32>
    %2 = tpu.matmul %0, %1, %cst {dimension_numbers = #tpu.dot_dimension_numbers<[1], [0], [0], [1], [0, 0, 1, 1], [], []>} : vector<8x128xf32>, vector<128x128xf32>, vector<8x128xf32> -> vector<8x128xf32>
    %c0_i32 = arith.constant 0 : i32
    %3 = arith.cmpi eq, %arg2, %c0_i32 : i32
    %4 = arith.extui %3 : i1 to i32
    %c0_i32_3 = arith.constant 0 : i32
    %5 = arith.cmpi ne, %4, %c0_i32_3 : i32
    scf.if %5 {
      %c0_6 = arith.constant 0 : index
      %c0_7 = arith.constant 0 : index
      %9 = vector.load %arg5[%c0_6, %c0_7] : memref<1x128xf32, #tpu.memory_space<vmem>>, vector<1x128xf32>
      %10 = vector.broadcast %9 : vector<1x128xf32> to vector<8x128xf32>
      %11 = arith.addf %2, %10 : vector<8x128xf32>
      %c0_8 = arith.constant 0 : index
      %c0_9 = arith.constant 0 : index
      %12 = vector.load %arg6[%c0_8, %c0_9] : memref<8x128xf32, #tpu.memory_space<vmem>>, vector<8x128xf32>
      tpu.vector_store %arg6[%c0_8, %c0_9], %11 {strides = array<i32>} : memref<8x128xf32, #tpu.memory_space<vmem>>, vector<8x128xf32>,
    } else {
    }
    %c0_i32_4 = arith.constant 0 : i32
    %6 = arith.cmpi ne, %arg2, %c0_i32_4 : i32
    %7 = arith.extui %6 : i1 to i32
    %c0_i32_5 = arith.constant 0 : i32
    %8 = arith.cmpi ne, %7, %c0_i32_5 : i32
    scf.if %8 {
      %c0_6 = arith.constant 0 : index
      %c0_7 = arith.constant 0 : index
      %9 = vector.load %arg6[%c0_6, %c0_7] : memref<8x128xf32, #tpu.memory_space<vmem>>, vector<8x128xf32>
      %10 = arith.addf %9, %2 : vector<8x128xf32>
      %c0_8 = arith.constant 0 : index
      %c0_9 = arith.constant 0 : index
      %11 = vector.load %arg6[%c0_8, %c0_9] : memref<8x128xf32, #tpu.memory_space<vmem>>, vector<8x128xf32>
      tpu.vector_store %arg6[%c0_8, %c0_9], %10 {strides = array<i32>} : memref<8x128xf32, #tpu.memory_space<vmem>>, vector<8x128xf32>,
    } else {
    }
    return
  }
  func.func @transform_0(%arg0: i32, %arg1: i32, %arg2: i32) -> (i32, i32) {
    %c0_i32 = arith.constant 0 : i32
    return %arg0, %arg2 : i32, i32
  }
  func.func @transform_1(%arg0: i32, %arg1: i32, %arg2: i32) -> (i32, i32) {
    %c0_i32 = arith.constant 0 : i32
    return %arg2, %arg1 : i32, i32
  }
  func.func @transform_2(%arg0: i32, %arg1: i32, %arg2: i32) -> (i32, i32) {
    %c0_i32 = arith.constant 0 : i32
    %c0_i32_0 = arith.constant 0 : i32
    return %c0_i32, %arg1 : i32, i32
  }
  func.func @transform_3(%arg0: i32, %arg1: i32, %arg2: i32) -> (i32, i32) {
    %c0_i32 = arith.constant 0 : i32
    return %arg0, %arg1 : i32, i32
  }
}

</mosaic_0001>

<llo_original>
// kernel: linear_net_forward.1
$region0: #{linear_net_forward.1}
  #allocation0 [shape = 'u32[]', space=smem, size = 0x4, offset = 0x4, fixed_abs, tag = 'smem constant byte address 0x4 - core index']
  #allocation1 [shape = 'u32[72,128]{1,0:T(1,128)}', space=vmem, size = 0x9000, scoped, tag = 'internal scratch']
  %s0 = inlined_call_operand.vmem [shape: f32[8,128], index: 0, kind: input, shape index: {}]
  %s1 = inlined_call_operand.vmem [shape: f32[128,128], index: 1, kind: input, shape index: {}]
  %s2 = inlined_call_operand.vmem [shape: f32[1,128], index: 2, kind: input, shape index: {}]
  %s3 = inlined_call_operand.vmem [shape: f32[8,128], index: 3, kind: output, shape index: {}]
  %s4 = sld [smem:[#allocation0]]
  $region30: #{linear_net_forward.1} parent=0
    _
  %s6 = ssub.s32 1, %s4
  %s7 = scalar_select 0, %s6, %s4
  // Predicated region
  $region2: #{linear_net_forward.1} parent=0 // pred_check
    _
  $region3: #{linear_net_forward.1} parent=0 // pred_check_branch
    %9 = sbr.rel (0) target = $region5
  $region4: #{linear_net_forward.1} parent=0 // pred_region
    _
  $region5: #{linear_net_forward.1} parent=0 // pred_fallthru
    _
  // Predicated region
  $region6: #{linear_net_forward.1} parent=0 // pred_check
    _
  $region7: #{linear_net_forward.1} parent=0 // pred_check_branch
    %11 = sbr.rel (0) target = $region9
  $region8: #{linear_net_forward.1} parent=0 // pred_region
    _
  $region9: #{linear_net_forward.1} parent=0 // pred_fallthru
    _
  // Predicated region
  $region10: #{linear_net_forward.1} parent=0 // pred_check
    _
  $region11: #{linear_net_forward.1} parent=0 // pred_check_branch
    %13 = sbr.rel (0) target = $region13
  $region12: #{linear_net_forward.1} parent=0 // pred_region
    _
  $region13: #{linear_net_forward.1} parent=0 // pred_fallthru
    _
  %v14 = vld [vmem:[%s0] sm:$0xff]
  %v15 = vld [vmem:[%s1] sm:$0xff]
  %v16 = vld [vmem:[%s1 + $0x8] sm:$0xff]
  %v17 = vld [vmem:[%s1 + $0x10] sm:$0xff]
  %v18 = vld [vmem:[%s1 + $0x18] sm:$0xff]
  %v19 = vld [vmem:[%s1 + $0x20] sm:$0xff]
  %v20 = vld [vmem:[%s1 + $0x28] sm:$0xff]
  %v21 = vld [vmem:[%s1 + $0x30] sm:$0xff]
  %v22 = vld [vmem:[%s1 + $0x38] sm:$0xff]
  %v23 = vld [vmem:[%s1 + $0x40] sm:$0xff]
  %v24 = vld [vmem:[%s1 + $0x48] sm:$0xff]
  %v25 = vld [vmem:[%s1 + $0x50] sm:$0xff]
  %v26 = vld [vmem:[%s1 + $0x58] sm:$0xff]
  %v27 = vld [vmem:[%s1 + $0x60] sm:$0xff]
  %v28 = vld [vmem:[%s1 + $0x68] sm:$0xff]
  %v29 = vld [vmem:[%s1 + $0x70] sm:$0xff]
  %v30 = vld [vmem:[%s1 + $0x78] sm:$0xff]
  %31 = vmatpush.msra.mxu0 %v30
  %32 = vmatpush.msra.mxu0 %v29
  %33 = vmatpush.msra.mxu0 %v28
  %34 = vmatpush.msra.mxu0 %v27
  %35 = vmatpush.msra.mxu0 %v26
  %36 = vmatpush.msra.mxu0 %v25
  %37 = vmatpush.msra.mxu0 %v24
  %38 = vmatpush.msra.mxu0 %v23
  %39 = vmatpush.msra.mxu0 %v22
  %40 = vmatpush.msra.mxu0 %v21
  %41 = vmatpush.msra.mxu0 %v20
  %42 = vmatpush.msra.mxu0 %v19
  %43 = vmatpush.msra.mxu0 %v18
  %44 = vmatpush.msra.mxu0 %v17
  %45 = vmatpush.msra.mxu0 %v16
  %46 = vmatpush.msra.mxu0 %v15
  %47 = vmatmul.f32.gmra.mxu0 %v14
  %v48 = vpop.f32.mrf.mxu0
  %v49 = vadd.f32 0.0, %v48
  %50 = vdwg.mxu0
  %p51 = scmp.eq.s32.totalorder 0, 0
  // Predicated region
  $region14: #{linear_net_forward.1} parent=0 // pred_check
    %p52 = pneg %p51
  $region15: #{linear_net_forward.1} parent=0 // pred_check_branch
    %54 = sbr.rel (%p52) target = $region17
  $region16: #{linear_net_forward.1} parent=0 // pred_region
    %v55 = vld [vmem:[%s2] sm:$0x1]
    %v57 = vperm.slane %v55, 0
    %v59 = vadd.f32 %v49, %v57
    %60 = vst [vmem:[%s3] sm:$0xff] %v59
  $region17: #{linear_net_forward.1} parent=0 // pred_fallthru
    _
  %p61 = scmp.ne.s32.totalorder 0, 0
  // Predicated region
  $region18: #{linear_net_forward.1} parent=0 // pred_check
    %p62 = pneg %p61
  $region19: #{linear_net_forward.1} parent=0 // pred_check_branch
    %64 = sbr.rel (%p62) target = $region21
  $region20: #{linear_net_forward.1} parent=0 // pred_region
    %v65 = vld [vmem:[%s3] sm:$0xff]
    %v66 = vadd.f32 %v65, %v49
    %67 = vst [vmem:[%s3] sm:$0xff] %v66
  $region21: #{linear_net_forward.1} parent=0 // pred_fallthru
    _
  // Predicated region
  $region22: #{linear_net_forward.1} parent=0 // pred_check
    _
  $region23: #{linear_net_forward.1} parent=0 // pred_check_branch
    %69 = sbr.rel (0) target = $region25
  $region24: #{linear_net_forward.1} parent=0 // pred_region
    _
  $region25: #{linear_net_forward.1} parent=0 // pred_fallthru
    _
  // Predicated region
  $region26: #{linear_net_forward.1} parent=0 // pred_check
    _
  $region27: #{linear_net_forward.1} parent=0 // pred_check_branch
    %71 = sbr.rel (0) target = $region29
  $region28: #{linear_net_forward.1} parent=0 // pred_region
    _
  $region29: #{linear_net_forward.1} parent=0 // pred_fallthru
    _

</llo_original>
